<compile_context>
chip_gen: v7x
topology: tpu7x:2x2x1
jax: 0.10.0
libtpu: 0.0.40
codegen_flags: <defaults>
</compile_context>

<pallas_src>
import jax
import jax.numpy as jnp
from jax.experimental import pallas as pl
from jax.experimental.pallas import tpu as pltpu

EPS = 1e-8


def _make_dist_kernel(tau, num_classes):
    inv_tau = 1.0 / float(tau)
    inv_c = 1.0 / float(num_classes)

    def kernel(s_ref, t_ref, out_ref):
        ti = pl.program_id(1)

        @pl.when(ti == 0)
        def _init():
            out_ref[...] = jnp.zeros_like(out_ref)

        s = s_ref[...].astype(jnp.float32) * inv_tau
        t = t_ref[...].astype(jnp.float32) * inv_tau

        def softmax(x):
            m = jnp.max(x, axis=1, keepdims=True)
            e = jnp.exp(x - m)
            return e * (1.0 / jnp.sum(e, axis=1, keepdims=True))

        # Softmax rows sum to 1 -> row mean is exactly 1/C.  Center once and
        # share the centered products between the inter and intra terms.
        u_s = softmax(s) - inv_c
        u_t = softmax(t) - inv_c
        p_ab = u_s * u_t
        p_aa = u_s * u_s
        p_bb = u_t * u_t

        # inter: per-row Pearson (cosine of the centered rows), one sqrt/row.
        num = jnp.sum(p_ab, axis=1, keepdims=True)
        na2 = jnp.sum(p_aa, axis=1, keepdims=True)
        nb2 = jnp.sum(p_bb, axis=1, keepdims=True)
        row_p = num / (jnp.sqrt(na2 * nb2) + EPS)            # (tile_n, 1)

        # intra: per-class (centered) sufficient statistics, accumulated into
        # the VMEM-resident output block.  Rows: 0=sum u_s, 1=sum u_t,
        # 2=sum u_s*u_t, 3=sum u_s^2, 4=sum u_t^2, 5[,0]=sum of row Pearson.
        out_ref[0:1, :] += jnp.sum(u_s, axis=0, keepdims=True)
        out_ref[1:2, :] += jnp.sum(u_t, axis=0, keepdims=True)
        out_ref[2:3, :] += jnp.sum(p_ab, axis=0, keepdims=True)
        out_ref[3:4, :] += jnp.sum(p_aa, axis=0, keepdims=True)
        out_ref[4:5, :] += jnp.sum(p_bb, axis=0, keepdims=True)
        out_ref[5:6, 0:1] += jnp.sum(row_p, axis=0, keepdims=True)

    return kernel


def _vmem_budget():
    """Generation-aware VMEM limits (v5e/v6e: 128 MiB, v7x: 64 MiB per TC)."""
    try:
        cap = int(pltpu.get_tpu_info().vmem_capacity_bytes)
    except Exception:
        cap = 64 * 1024 * 1024               # conservative fallback (v7x per-TC)
    vmem_limit = min(int(cap * 0.8), 100 * 1024 * 1024)
    work_budget = int(vmem_limit * 0.6)      # double-buffered inputs + live temps
    return vmem_limit, work_budget


def _choose_tile(n, c, itemsize, work_budget):
    """Largest row tile fitting the working-set budget; prefer tiles that
    divide N exactly so no padding (no extra HBM pad traffic) is needed."""
    pack = max(8, 32 // itemsize)                       # sublane packing of input
    # 2 inputs x 2 pipeline buffers + ~7 live f32 (tile, C) temporaries
    bytes_per_row = c * (2 * 2 * itemsize + 7 * 4)
    max_t = max(pack, (work_budget // max(bytes_per_row, 1)) // pack * pack)
    if n <= max_t:
        return n, n                                      # single full-batch block
    if n % pack == 0:
        t = max_t
        while t >= pack:
            if n % t == 0:
                # accept unless it blows up the grid-step count
                if (n // t) <= 4 * ((n + max_t - 1) // max_t):
                    return t, n
                break
            t -= pack
    # fall back: pad the batch (padded rows are exactly neutral in the kernel)
    t = max_t
    n_pad = ((n + t - 1) // t) * t
    return t, n_pad


def dist_loss(logits_S, logits_T, *, tau=1.0, inter_loss_weight=1.0,
              intra_loss_weight=1.0, loss_weight=1.0, tile_n=None):
    """Pallas implementation of DISTLoss.forward."""
    # TODO(synk): teacher_detach only affects gradients; it is a no-op in the
    # forward pass and is therefore not represented here.
    assert logits_S.shape == logits_T.shape and logits_S.ndim == 2
    n, c = logits_S.shape
    itemsize = jnp.dtype(logits_S.dtype).itemsize
    vmem_limit, work_budget = _vmem_budget()

    if tile_n is None:
        t, n_pad = _choose_tile(n, c, itemsize, work_budget)
    else:
        t = int(tile_n)
        pack = max(8, 32 // itemsize)
        assert t == n or t % pack == 0
        n_pad = ((n + t - 1) // t) * t

    if n_pad != n:
        # Zero rows softmax to the uniform 1/C row; centered they are ~0 and
        # contribute nothing to any statistic -> no masking or correction.
        pad = ((0, n_pad - n), (0, 0))
        logits_S = jnp.pad(logits_S, pad)
        logits_T = jnp.pad(logits_T, pad)

    total_tiles = n_pad // t
    # Leading "parallel" chunk axis: lets v7x's two TensorCores split the
    # batch; costs nothing on single-TC chips.
    num_chunks = 2 if (total_tiles >= 2 and total_tiles % 2 == 0) else 1
    tiles_per_chunk = total_tiles // num_chunks

    kernel = _make_dist_kernel(tau, c)

    stats = pl.pallas_call(
        kernel,
        out_shape=jax.ShapeDtypeStruct((num_chunks * 8, c), jnp.float32),
        grid=(num_chunks, tiles_per_chunk),
        in_specs=[
            pl.BlockSpec((t, c), lambda ci, ti: (ci * tiles_per_chunk + ti, 0)),
            pl.BlockSpec((t, c), lambda ci, ti: (ci * tiles_per_chunk + ti, 0)),
        ],
        out_specs=pl.BlockSpec((8, c), lambda ci, ti: (ci, 0)),
        compiler_params=pltpu.CompilerParams(
            dimension_semantics=("parallel", "arbitrary"),
            vmem_limit_bytes=vmem_limit,
        ),
    )(logits_S, logits_T)

    # Tiny O(C) epilogue in plain JAX: combine per-chunk partial statistics
    # and finish the Pearson / weighting math.
    tot = stats.reshape(num_chunks, 8, c).sum(axis=0)
    sa, sb, sab, saa, sbb = tot[0], tot[1], tot[2], tot[3], tot[4]
    isum = tot[5, 0]

    inv_n = 1.0 / float(n)
    tau2 = float(tau) ** 2

    inter_loss = tau2 * (1.0 - isum * inv_n)

    cov = sab - sa * sb * inv_n
    var_a = jnp.maximum(saa - sa * sa * inv_n, 0.0)
    var_b = jnp.maximum(sbb - sb * sb * inv_n, 0.0)
    col_p = cov / (jnp.sqrt(var_a * var_b) + EPS)
    intra_loss = tau2 * (1.0 - jnp.mean(col_p))

    kd = inter_loss_weight * inter_loss + intra_loss_weight * intra_loss
    return (kd * loss_weight).astype(jnp.float32)


def _dist_loss_ref(logits_S, logits_T, *, tau=1.0, inter_loss_weight=1.0,
                   intra_loss_weight=1.0, loss_weight=1.0):
    """Pure-JAX reference mirroring the PyTorch module."""
    y_s = jax.nn.softmax(logits_S.astype(jnp.float32) / tau, axis=1)
    y_t = jax.nn.softmax(logits_T.astype(jnp.float32) / tau, axis=1)

    def inter_class_relation(a, b):
        a_c = a - a.mean(1, keepdims=True)
        b_c = b - b.mean(1, keepdims=True)
        cos = (a_c * b_c).sum(1) / (
            jnp.linalg.norm(a_c, axis=1) * jnp.linalg.norm(b_c, axis=1) + EPS)
        return 1.0 - cos.mean()

    inter = tau ** 2 * inter_class_relation(y_s, y_t)
    intra = tau ** 2 * inter_class_relation(y_s.T, y_t.T)
    return (inter_loss_weight * inter + intra_loss_weight * intra) * loss_weight


if __name__ == "__main__":
    key = jax.random.PRNGKey(0)
    k = jax.random.split(key, 6)

    # Case 1: tiny single-block (N=8, C=32), non-default tau / weights.
    s1 = jax.random.normal(k[0], (8, 32), dtype=jnp.float32)
    t1 = jax.random.normal(k[1], (8, 32), dtype=jnp.float32)
    out1 = jax.block_until_ready(
        dist_loss(s1, t1, tau=2.0, inter_loss_weight=1.0,
                  intra_loss_weight=0.5, loss_weight=1.5))
    ref1 = _dist_loss_ref(s1, t1, tau=2.0, inter_loss_weight=1.0,
                          intra_loss_weight=0.5, loss_weight=1.5)
    assert jnp.allclose(out1, ref1, atol=1e-4, rtol=1e-4), (out1, ref1)

    # Case 2: tiled + 2-chunk ("parallel") path: N=64, tile 16 -> 2 chunks x 2.
    s2 = jax.random.normal(k[2], (64, 160), dtype=jnp.float32)
    t2 = jax.random.normal(k[3], (64, 160), dtype=jnp.float32)
    out2 = jax.block_until_ready(dist_loss(s2, t2, tile_n=16))
    ref2 = _dist_loss_ref(s2, t2)
    assert jnp.allclose(out2, ref2, atol=1e-4, rtol=1e-4), (out2, ref2)

    # Case 3: uneven batch exercising the neutral zero-padding path (N=20).
    s3 = jax.random.normal(k[4], (20, 160), dtype=jnp.float32)
    t3 = jax.random.normal(k[5], (20, 160), dtype=jnp.float32)
    out3 = jax.block_until_ready(dist_loss(s3, t3, tile_n=8))
    ref3 = _dist_loss_ref(s3, t3)
    assert jnp.allclose(out3, ref3, atol=1e-4, rtol=1e-4), (out3, ref3)

    print("KERNEL_OK")
</pallas_src>

<mosaic_0001>
module attributes {stable_mosaic.version = 11 : i64} {
  func.func @kernel(%arg0: i32, %arg1: i32, %arg2: memref<8x32xf32, #tpu.memory_space<vmem>>, %arg3: memref<8x32xf32, #tpu.memory_space<vmem>>, %arg4: memref<8x32xf32, #tpu.memory_space<vmem>>) attributes {dimension_semantics = [#tpu.dimension_semantics<parallel>, #tpu.dimension_semantics<arbitrary>], iteration_bounds = array<i64: 1, 1>, scalar_prefetch = 0 : i64, scratch_operands = 0 : i64, tpu.core_type = #tpu.core_type<tc>, window_params = [{transform_indices = @transform_0, window_bounds = array<i64: 8, 32>}, {transform_indices = @transform_1, window_bounds = array<i64: 8, 32>}, {transform_indices = @transform_2, window_bounds = array<i64: 8, 32>}]} {
    %c0_i32 = arith.constant 0 : i32
    %0 = arith.cmpi eq, %arg1, %c0_i32 : i32
    %1 = arith.extui %0 : i1 to i32
    %c0_i32_0 = arith.constant 0 : i32
    %2 = arith.cmpi ne, %1, %c0_i32_0 : i32
    scf.if %2 {
      %cst_42 = arith.constant 0.000000e+00 : f32
      %79 = vector.broadcast %cst_42 : f32 to vector<8x32xf32>
      %c0_43 = arith.constant 0 : index
      %c0_44 = arith.constant 0 : index
      %80 = vector.load %arg4[%c0_43, %c0_44] : memref<8x32xf32, #tpu.memory_space<vmem>>, vector<8x32xf32>
      tpu.vector_store %arg4[%c0_43, %c0_44], %79 {strides = array<i32>} : memref<8x32xf32, #tpu.memory_space<vmem>>, vector<8x32xf32>,
    } else {
    }
    %c0 = arith.constant 0 : index
    %c0_1 = arith.constant 0 : index
    %3 = vector.load %arg2[%c0, %c0_1] : memref<8x32xf32, #tpu.memory_space<vmem>>, vector<8x32xf32>
    %cst = arith.constant 5.000000e-01 : f32
    %4 = vector.broadcast %cst : f32 to vector<8x32xf32>
    %5 = arith.mulf %3, %4 : vector<8x32xf32>
    %c0_2 = arith.constant 0 : index
    %c0_3 = arith.constant 0 : index
    %6 = vector.load %arg3[%c0_2, %c0_3] : memref<8x32xf32, #tpu.memory_space<vmem>>, vector<8x32xf32>
    %cst_4 = arith.constant 5.000000e-01 : f32
    %7 = vector.broadcast %cst_4 : f32 to vector<8x32xf32>
    %8 = arith.mulf %6, %7 : vector<8x32xf32>
    %cst_5 = arith.constant dense<0xFF800000> : vector<8xf32>
    %9 = vector.multi_reduction <maximumf>, %5, %cst_5 [1] : vector<8x32xf32> to vector<8xf32>
    %10 = vector.shape_cast %9 : vector<8xf32> to vector<8x1xf32>
    %11 = vector.broadcast %10 : vector<8x1xf32> to vector<8x32xf32>
    %12 = arith.subf %5, %11 : vector<8x32xf32>
    %13 = math.exp %12 : vector<8x32xf32>
    %cst_6 = arith.constant dense<0.000000e+00> : vector<8xf32>
    %14 = vector.multi_reduction <add>, %13, %cst_6 [1] : vector<8x32xf32> to vector<8xf32>
    %15 = vector.shape_cast %14 : vector<8xf32> to vector<8x1xf32>
    %cst_7 = arith.constant 1.000000e+00 : f32
    %16 = vector.broadcast %cst_7 : f32 to vector<8x1xf32>
    %17 = arith.divf %16, %15 : vector<8x1xf32>
    %18 = vector.broadcast %17 : vector<8x1xf32> to vector<8x32xf32>
    %19 = arith.mulf %13, %18 : vector<8x32xf32>
    %cst_8 = arith.constant 3.125000e-02 : f32
    %20 = vector.broadcast %cst_8 : f32 to vector<8x32xf32>
    %21 = arith.subf %19, %20 : vector<8x32xf32>
    %cst_9 = arith.constant dense<0xFF800000> : vector<8xf32>
    %22 = vector.multi_reduction <maximumf>, %8, %cst_9 [1] : vector<8x32xf32> to vector<8xf32>
    %23 = vector.shape_cast %22 : vector<8xf32> to vector<8x1xf32>
    %24 = vector.broadcast %23 : vector<8x1xf32> to vector<8x32xf32>
    %25 = arith.subf %8, %24 : vector<8x32xf32>
    %26 = math.exp %25 : vector<8x32xf32>
    %cst_10 = arith.constant dense<0.000000e+00> : vector<8xf32>
    %27 = vector.multi_reduction <add>, %26, %cst_10 [1] : vector<8x32xf32> to vector<8xf32>
    %28 = vector.shape_cast %27 : vector<8xf32> to vector<8x1xf32>
    %cst_11 = arith.constant 1.000000e+00 : f32
    %29 = vector.broadcast %cst_11 : f32 to vector<8x1xf32>
    %30 = arith.divf %29, %28 : vector<8x1xf32>
    %31 = vector.broadcast %30 : vector<8x1xf32> to vector<8x32xf32>
    %32 = arith.mulf %26, %31 : vector<8x32xf32>
    %cst_12 = arith.constant 3.125000e-02 : f32
    %33 = vector.broadcast %cst_12 : f32 to vector<8x32xf32>
    %34 = arith.subf %32, %33 : vector<8x32xf32>
    %35 = arith.mulf %21, %34 : vector<8x32xf32>
    %36 = arith.mulf %21, %21 : vector<8x32xf32>
    %37 = arith.mulf %34, %34 : vector<8x32xf32>
    %cst_13 = arith.constant dense<0.000000e+00> : vector<8xf32>
    %38 = vector.multi_reduction <add>, %35, %cst_13 [1] : vector<8x32xf32> to vector<8xf32>
    %39 = vector.shape_cast %38 : vector<8xf32> to vector<8x1xf32>
    %cst_14 = arith.constant dense<0.000000e+00> : vector<8xf32>
    %40 = vector.multi_reduction <add>, %36, %cst_14 [1] : vector<8x32xf32> to vector<8xf32>
    %41 = vector.shape_cast %40 : vector<8xf32> to vector<8x1xf32>
    %cst_15 = arith.constant dense<0.000000e+00> : vector<8xf32>
    %42 = vector.multi_reduction <add>, %37, %cst_15 [1] : vector<8x32xf32> to vector<8xf32>
    %43 = vector.shape_cast %42 : vector<8xf32> to vector<8x1xf32>
    %44 = arith.mulf %41, %43 : vector<8x1xf32>
    %45 = math.sqrt %44 : vector<8x1xf32>
    %cst_16 = arith.constant 9.99999993E-9 : f32
    %46 = vector.broadcast %cst_16 : f32 to vector<8x1xf32>
    %47 = arith.addf %45, %46 : vector<8x1xf32>
    %48 = arith.divf %39, %47 : vector<8x1xf32>
    %c0_17 = arith.constant 0 : index
    %c0_18 = arith.constant 0 : index
    %49 = vector.load %arg4[%c0_17, %c0_18] : memref<8x32xf32, #tpu.memory_space<vmem>>, vector<1x32xf32>
    %cst_19 = arith.constant dense<0.000000e+00> : vector<32xf32>
    %50 = vector.multi_reduction <add>, %21, %cst_19 [0] : vector<8x32xf32> to vector<32xf32>
    %51 = vector.shape_cast %50 : vector<32xf32> to vector<1x32xf32>
    %52 = arith.addf %49, %51 : vector<1x32xf32>
    %c0_20 = arith.constant 0 : index
    %c0_21 = arith.constant 0 : index
    %53 = vector.load %arg4[%c0_20, %c0_21] : memref<8x32xf32, #tpu.memory_space<vmem>>, vector<1x32xf32>
    tpu.vector_store %arg4[%c0_20, %c0_21], %52 {strides = array<i32>} : memref<8x32xf32, #tpu.memory_space<vmem>>, vector<1x32xf32>,
    %c1 = arith.constant 1 : index
    %c0_22 = arith.constant 0 : index
    %54 = vector.load %arg4[%c1, %c0_22] : memref<8x32xf32, #tpu.memory_space<vmem>>, vector<1x32xf32>
    %cst_23 = arith.constant dense<0.000000e+00> : vector<32xf32>
    %55 = vector.multi_reduction <add>, %34, %cst_23 [0] : vector<8x32xf32> to vector<32xf32>
    %56 = vector.shape_cast %55 : vector<32xf32> to vector<1x32xf32>
    %57 = arith.addf %54, %56 : vector<1x32xf32>
    %c1_24 = arith.constant 1 : index
    %c0_25 = arith.constant 0 : index
    %58 = vector.load %arg4[%c1_24, %c0_25] : memref<8x32xf32, #tpu.memory_space<vmem>>, vector<1x32xf32>
    tpu.vector_store %arg4[%c1_24, %c0_25], %57 {strides = array<i32>} : memref<8x32xf32, #tpu.memory_space<vmem>>, vector<1x32xf32>,
    %c2 = arith.constant 2 : index
    %c0_26 = arith.constant 0 : index
    %59 = vector.load %arg4[%c2, %c0_26] : memref<8x32xf32, #tpu.memory_space<vmem>>, vector<1x32xf32>
    %cst_27 = arith.constant dense<0.000000e+00> : vector<32xf32>
    %60 = vector.multi_reduction <add>, %35, %cst_27 [0] : vector<8x32xf32> to vector<32xf32>
    %61 = vector.shape_cast %60 : vector<32xf32> to vector<1x32xf32>
    %62 = arith.addf %59, %61 : vector<1x32xf32>
    %c2_28 = arith.constant 2 : index
    %c0_29 = arith.constant 0 : index
    %63 = vector.load %arg4[%c2_28, %c0_29] : memref<8x32xf32, #tpu.memory_space<vmem>>, vector<1x32xf32>
    tpu.vector_store %arg4[%c2_28, %c0_29], %62 {strides = array<i32>} : memref<8x32xf32, #tpu.memory_space<vmem>>, vector<1x32xf32>,
    %c3 = arith.constant 3 : index
    %c0_30 = arith.constant 0 : index
    %64 = vector.load %arg4[%c3, %c0_30] : memref<8x32xf32, #tpu.memory_space<vmem>>, vector<1x32xf32>
    %cst_31 = arith.constant dense<0.000000e+00> : vector<32xf32>
    %65 = vector.multi_reduction <add>, %36, %cst_31 [0] : vector<8x32xf32> to vector<32xf32>
    %66 = vector.shape_cast %65 : vector<32xf32> to vector<1x32xf32>
    %67 = arith.addf %64, %66 : vector<1x32xf32>
    %c3_32 = arith.constant 3 : index
    %c0_33 = arith.constant 0 : index
    %68 = vector.load %arg4[%c3_32, %c0_33] : memref<8x32xf32, #tpu.memory_space<vmem>>, vector<1x32xf32>
    tpu.vector_store %arg4[%c3_32, %c0_33], %67 {strides = array<i32>} : memref<8x32xf32, #tpu.memory_space<vmem>>, vector<1x32xf32>,
    %c4 = arith.constant 4 : index
    %c0_34 = arith.constant 0 : index
    %69 = vector.load %arg4[%c4, %c0_34] : memref<8x32xf32, #tpu.memory_space<vmem>>, vector<1x32xf32>
    %cst_35 = arith.constant dense<0.000000e+00> : vector<32xf32>
    %70 = vector.multi_reduction <add>, %37, %cst_35 [0] : vector<8x32xf32> to vector<32xf32>
    %71 = vector.shape_cast %70 : vector<32xf32> to vector<1x32xf32>
    %72 = arith.addf %69, %71 : vector<1x32xf32>
    %c4_36 = arith.constant 4 : index
    %c0_37 = arith.constant 0 : index
    %73 = vector.load %arg4[%c4_36, %c0_37] : memref<8x32xf32, #tpu.memory_space<vmem>>, vector<1x32xf32>
    tpu.vector_store %arg4[%c4_36, %c0_37], %72 {strides = array<i32>} : memref<8x32xf32, #tpu.memory_space<vmem>>, vector<1x32xf32>,
    %c5 = arith.constant 5 : index
    %c0_38 = arith.constant 0 : index
    %74 = vector.load %arg4[%c5, %c0_38] : memref<8x32xf32, #tpu.memory_space<vmem>>, vector<1x1xf32>
    %cst_39 = arith.constant dense<0.000000e+00> : vector<1xf32>
    %75 = vector.multi_reduction <add>, %48, %cst_39 [0] : vector<8x1xf32> to vector<1xf32>
    %76 = vector.shape_cast %75 : vector<1xf32> to vector<1x1xf32>
    %77 = arith.addf %74, %76 : vector<1x1xf32>
    %c5_40 = arith.constant 5 : index
    %c0_41 = arith.constant 0 : index
    %78 = vector.load %arg4[%c5_40, %c0_41] : memref<8x32xf32, #tpu.memory_space<vmem>>, vector<1x1xf32>
    tpu.vector_store %arg4[%c5_40, %c0_41], %77 {strides = array<i32>} : memref<8x32xf32, #tpu.memory_space<vmem>>, vector<1x1xf32>,
    return
  }
  func.func @transform_0(%arg0: i32, %arg1: i32) -> (i32, i32) {
    %c1_i32 = arith.constant 1 : i32
    %0 = arith.muli %arg0, %c1_i32 : i32
    %1 = arith.addi %0, %arg1 : i32
    %c0_i32 = arith.constant 0 : i32
    %c0_i32_0 = arith.constant 0 : i32
    return %1, %c0_i32 : i32, i32
  }
  func.func @transform_1(%arg0: i32, %arg1: i32) -> (i32, i32) {
    %c1_i32 = arith.constant 1 : i32
    %0 = arith.muli %arg0, %c1_i32 : i32
    %1 = arith.addi %0, %arg1 : i32
    %c0_i32 = arith.constant 0 : i32
    %c0_i32_0 = arith.constant 0 : i32
    return %1, %c0_i32 : i32, i32
  }
  func.func @transform_2(%arg0: i32, %arg1: i32) -> (i32, i32) {
    %c0_i32 = arith.constant 0 : i32
    %c0_i32_0 = arith.constant 0 : i32
    return %arg0, %c0_i32 : i32, i32
  }
}

</mosaic_0001>

<llo_original>
// kernel: tpu_custom_call.1
$region0: #{tpu_custom_call.1}
  #allocation0 [shape = 'u32[]', space=smem, size = 0x4, offset = 0x4, fixed_abs, tag = 'smem constant byte address 0x4 - core index']
  #allocation1 [shape = 'u32[144,128]{1,0:T(1,128)}', space=vmem, size = 0x12000, scoped, tag = 'internal scratch']
  %s0 = inlined_call_operand.hbm [shape: f32[8,32], index: 0, kind: input, shape index: {}]
  %s1 = inlined_call_operand.hbm [shape: f32[8,32], index: 1, kind: input, shape index: {}]
  %s2 = inlined_call_operand.hbm [shape: f32[8,32], index: 2, kind: output, shape index: {}]
  %s3 = sld [smem:[#allocation0]]
  $region30: #{tpu_custom_call.1} parent=0
    _
  %s5 = ssub.s32 1, %s3
  %s6 = scalar_select 0, %s5, %s3
  $region1: #{tpu_custom_call.1} parent=0
    #allocation2 [shape = 'u8[4096]{0}', space=vmem, size = 0x1000, scoped, tag = 'input window, operand 0, single buffered']
    #allocation3 [shape = 's32[1]{0}', space=sflag, size = 0x4, scoped, tag = 'scoped memory for tpu_custom_call.1']
    #allocation4 [shape = 's32[1]{0}', space=sflag, size = 0x4, scoped, tag = 'scoped memory for tpu_custom_call.1']
    #allocation5 [shape = 'u8[4096]{0}', space=vmem, size = 0x1000, scoped, tag = 'input window, operand 1, single buffered']
    #allocation6 [shape = 's32[1]{0}', space=sflag, size = 0x4, scoped, tag = 'scoped memory for tpu_custom_call.1']
    #allocation7 [shape = 'u8[4096]{0}', space=vmem, size = 0x1000, scoped, tag = 'output window, operand 0, single buffered']
    %7 = vsyncpa [#allocation3], 0
    %8 = vsyncpa [#allocation6], 0
    %9 = vsyncpa [#allocation4], 0
    // Predicated region
    $region2: #{tpu_custom_call.1} parent=1 // pred_check
      _
    $region3: #{tpu_custom_call.1} parent=1 // pred_check_branch
      %11 = sbr.rel (0) target = $region5
    $region4: #{tpu_custom_call.1} parent=1 // pred_region
      %s12 = sadd.s32 0, 0
      %s14 = ssub.s32 128, 128
      %15 = vsyncadd [#allocation3], %s14
      %s16 = smul.addr %s12, 128
      %s17 = scalar_lea.hbm %s0, %s16
      %s19 = sshll.u32 [#allocation2], 4
      %s20 = int_to_ptr.vmem [resolvable:$true] %s19
      %22 = dma.hbm_to_vmem [thread:$0]  %s17, 128, %s20, [#allocation3]
    $region5: #{tpu_custom_call.1} parent=1 // pred_fallthru
      _
    // Predicated region
    $region6: #{tpu_custom_call.1} parent=1 // pred_check
      _
    $region7: #{tpu_custom_call.1} parent=1 // pred_check_branch
      %24 = sbr.rel (0) target = $region9
    $region8: #{tpu_custom_call.1} parent=1 // pred_region
      %s25 = sadd.s32 0, 0
      %s27 = ssub.s32 128, 128
      %28 = vsyncadd [#allocation6], %s27
      %s29 = smul.addr %s25, 128
      %s30 = scalar_lea.hbm %s1, %s29
      %s32 = sshll.u32 [#allocation5], 4
      %s33 = int_to_ptr.vmem [resolvable:$true] %s32
      %35 = dma.hbm_to_vmem [thread:$0]  %s30, 128, %s33, [#allocation6]
    $region9: #{tpu_custom_call.1} parent=1 // pred_fallthru
      _
    // Predicated region
    $region10: #{tpu_custom_call.1} parent=1 // pred_check
      _
    $region11: #{tpu_custom_call.1} parent=1 // pred_check_branch
      %37 = sbr.rel (0) target = $region13
    $region12: #{tpu_custom_call.1} parent=1 // pred_region
      %38 = dma.done [#allocation3], 128
    $region13: #{tpu_custom_call.1} parent=1 // pred_fallthru
      _
    // Predicated region
    $region14: #{tpu_custom_call.1} parent=1 // pred_check
      _
    $region15: #{tpu_custom_call.1} parent=1 // pred_check_branch
      %40 = sbr.rel (0) target = $region17
    $region16: #{tpu_custom_call.1} parent=1 // pred_region
      %41 = dma.done [#allocation6], 128
    $region17: #{tpu_custom_call.1} parent=1 // pred_fallthru
      _
    %s42 = sadd.s32 0, 0
    %s43 = sadd.s32 0, 0
    %p44 = scmp.eq.s32.totalorder 0, 0
    // Predicated region
    $region18: #{tpu_custom_call.1} parent=1 // pred_check
      %p45 = pneg %p44
    $region19: #{tpu_custom_call.1} parent=1 // pred_check_branch
      %47 = sbr.rel (%p45) target = $region21
    $region20: #{tpu_custom_call.1} parent=1 // pred_region
      %vm48 = vcmask 261120
      %49 = vst.msk [vmem:[#allocation7] sm:$0xff] %vm48, 0.0
    $region21: #{tpu_custom_call.1} parent=1 // pred_fallthru
      _
    %v50 = vld [vmem:[#allocation2] sm:$0xff]
    %v51 = vmul.f32 %v50, 0.5
    %v52 = vld [vmem:[#allocation5] sm:$0xff]
    %v53 = vmul.f32 %v52, 0.5
    %vm54 = vcmask 261120
    %v55 = vsel %vm54, %v51, -inf
    %56 = vmax.xlane.f32.xlu0 %v55
    %v57 = vpop.xlane.xlu0 %56
    %v58 = vsub.f32 %v51, %v57
    %v59 = vmul.f32 %v58, 1.442695
    %v60 = vpow.pop %v59
    %v61 = vsel %vm54, %v60, 0.0
    %62 = vadd.xlane.f32.xlu0 %v61
    %v63 = vpop.xlane.xlu0 %62
    %v64 = vrcp.pop %v63
    %v65 = vmul.f32 1.0, %v64
    %v66 = vmul.f32 %v60, %v65
    %v67 = vsub.f32 %v66, 0.03125
    %v68 = vsel %vm54, %v53, -inf
    %69 = vmax.xlane.f32.xlu0 %v68
    %v70 = vpop.xlane.xlu0 %69
    %v71 = vsub.f32 %v53, %v70
    %v72 = vmul.f32 %v71, 1.442695
    %v73 = vpow.pop %v72
    %v74 = vsel %vm54, %v73, 0.0
    %75 = vadd.xlane.f32.xlu0 %v74
    %v76 = vpop.xlane.xlu0 %75
    %v77 = vrcp.pop %v76
    %v78 = vmul.f32 1.0, %v77
    %v79 = vmul.f32 %v73, %v78
    %v80 = vsub.f32 %v79, 0.03125
    %v81 = vmul.f32 %v67, %v80
    %v82 = vmul.f32 %v67, %v67
    %v83 = vmul.f32 %v80, %v80
    %v84 = vsel %vm54, %v81, 0.0
    %85 = vadd.xlane.f32.xlu0 %v84
    %v86 = vpop.xlane.xlu0 %85
    %v87 = vsel %vm54, %v82, 0.0
    %88 = vadd.xlane.f32.xlu0 %v87
    %v89 = vpop.xlane.xlu0 %88
    %v90 = vsel %vm54, %v83, 0.0
    %91 = vadd.xlane.f32.xlu0 %v90
    %v92 = vpop.xlane.xlu0 %91
    %v93 = vmul.f32 %v89, %v92
    %v94 = vrsqrt.pop %v93
    %v95 = vmul.f32 %v93, %v94
    %vm96 = vcmp.eq.f32.partialorder %v93, inf
    %v97 = vsel %vm96, %v93, %v95
    %vm98 = vcmp.eq.f32.partialorder %v93, 0.0
    %v99 = vand.u32 %v93, 2147483648
    %v100 = vsel %vm98, %v99, %v97
    %v101 = vadd.f32 %v100, 1e-08
    %v102 = vrcp.pop %v101
    %v103 = vmul.f32 %v86, %v102
    %v104 = vld [vmem:[#allocation7] sm:$0x1]
    %v105 = vsel %vm54, %v67, 0.0
    %v106 = vrot.slane %v105, 4
    %v107 = vadd.f32 %v105, %v106
    %v108 = vrot.slane %v107, 2
    %v109 = vadd.f32 %v107, %v108
    %v110 = vrot.slane %v109, 1
    %v111 = vadd.f32 %v109, %v110
    %v112 = vadd.f32 %v104, %v111
    %vm113 = vcmask 253952
    %114 = vst.msk [vmem:[#allocation7] sm:$0x1] %vm113, %v112
    %v115 = vld [vmem:[#allocation7 + $0x1] sm:$0x1]
    %v116 = vsel %vm54, %v80, 0.0
    %v117 = vrot.slane %v116, 4
    %v118 = vadd.f32 %v116, %v117
    %v119 = vrot.slane %v118, 2
    %v120 = vadd.f32 %v118, %v119
    %v121 = vrot.slane %v120, 1
    %v122 = vadd.f32 %v120, %v121
    %v123 = vadd.f32 %v115, %v122
    %124 = vst.msk [vmem:[#allocation7 + $0x1] sm:$0x1] %vm113, %v123
    %v125 = vld [vmem:[#allocation7 + $0x2] sm:$0x1]
    %v126 = vrot.slane %v84, 4
    %v127 = vadd.f32 %v84, %v126
    %v128 = vrot.slane %v127, 2
    %v129 = vadd.f32 %v127, %v128
    %v130 = vrot.slane %v129, 1
    %v131 = vadd.f32 %v129, %v130
    %v132 = vadd.f32 %v125, %v131
    %133 = vst.msk [vmem:[#allocation7 + $0x2] sm:$0x1] %vm113, %v132
    %v134 = vld [vmem:[#allocation7 + $0x3] sm:$0x1]
    %v135 = vrot.slane %v87, 4
    %v136 = vadd.f32 %v87, %v135
    %v137 = vrot.slane %v136, 2
    %v138 = vadd.f32 %v136, %v137
    %v139 = vrot.slane %v138, 1
    %v140 = vadd.f32 %v138, %v139
    %v141 = vadd.f32 %v134, %v140
    %142 = vst.msk [vmem:[#allocation7 + $0x3] sm:$0x1] %vm113, %v141
    %v143 = vld [vmem:[#allocation7 + $0x4] sm:$0x1]
    %v144 = vrot.slane %v90, 4
    %v145 = vadd.f32 %v90, %v144
    %v146 = vrot.slane %v145, 2
    %v147 = vadd.f32 %v145, %v146
    %v148 = vrot.slane %v147, 1
    %v149 = vadd.f32 %v147, %v148
    %v150 = vadd.f32 %v143, %v149
    %151 = vst.msk [vmem:[#allocation7 + $0x4] sm:$0x1] %vm113, %v150
    %v152 = vld [vmem:[#allocation7 + $0x5] sm:$0x1]
    %v153 = vrot.slane %v103, 4
    %v154 = vadd.f32 %v103, %v153
    %v155 = vrot.slane %v154, 2
    %v156 = vadd.f32 %v154, %v155
    %v157 = vrot.slane %v156, 1
    %v158 = vadd.f32 %v156, %v157
    %v159 = vadd.f32 %v152, %v158
    %vm160 = vcmask 0
    %161 = vst.msk [vmem:[#allocation7 + $0x5] sm:$0x1] %vm160, %v159
    // Predicated region
    $region22: #{tpu_custom_call.1} parent=1 // pred_check
      _
    $region23: #{tpu_custom_call.1} parent=1 // pred_check_branch
      %163 = sbr.rel (0) target = $region25
    $region24: #{tpu_custom_call.1} parent=1 // pred_region
      %s165 = ssub.s32 128, 128
      %166 = vsyncadd [#allocation4], %s165
      %s168 = sshll.u32 [#allocation7], 4
      %s169 = int_to_ptr.vmem [resolvable:$true] %s168
      %171 = dma.vmem_to_hbm [thread:$0]  %s169, 128, %s2, [#allocation4]
    $region25: #{tpu_custom_call.1} parent=1 // pred_fallthru
      _
    // Predicated region
    $region26: #{tpu_custom_call.1} parent=1 // pred_check
      _
    $region27: #{tpu_custom_call.1} parent=1 // pred_check_branch
      %173 = sbr.rel (0) target = $region29
    $region28: #{tpu_custom_call.1} parent=1 // pred_region
      %174 = dma.done [#allocation4], 128
    $region29: #{tpu_custom_call.1} parent=1 // pred_fallthru
      _
    %175 = vsyncpa [#allocation3], 1
    %176 = vsyncpa [#allocation6], 1
    %177 = vsyncpa [#allocation4], 1

</llo_original>
